<compile_context>
chip_gen: v7x
topology: tpu7x:2x2x1
jax: 0.10.0
libtpu: 0.0.40
codegen_flags: <defaults>
</compile_context>

<pallas_src>
import functools

import jax
import jax.numpy as jnp
from jax import lax
from jax.experimental import pallas as pl
from jax.experimental.pallas import tpu as pltpu


def _round_up(x, m):
    return ((x + m - 1) // m) * m


def _ntxent_kernel(zr_ref, zc_ref, lab_r_ref, lab_c_ref, colb_ref, w_ref, pc_ref,
                   wl_ref, ew_ref,
                   m_sc, l_sc, ps_sc,
                   *, inv_t, use_static_max, single_col):
    """One (tb x tc) block of the similarity matrix.

    zr_ref:    (tb, Dp)   anchor rows (pre-normalized, pre-scaled by sqrt(1/T))
    zc_ref:    (tc, Dp)   column tile of the same embeddings
    lab_r_ref: (tb, 1)    anchor labels (int32)
    lab_c_ref: (1, tc)    column labels (int32)
    colb_ref:  (1, tc)    column bias: 0.0 valid / -1e30 padded
    w_ref:     (tb, 1)    anchor weights (f32)
    pc_ref:    (tb, 1)    per-anchor positive count |P(i)| (f32, 0 for padded rows)
    wl_ref:    (tb, 1)    output: w_i * L_i * has_pos_i
    ew_ref:    (tb, 1)    output: w_i * has_pos_i
    scratch:   (tb, 1)x3  running max / sum-exp / positive-logit sum (streaming only)
    """
    i = pl.program_id(0)
    k = pl.program_id(1)
    nk = pl.num_programs(1)
    tb = zr_ref.shape[0]
    tc = zc_ref.shape[0]

    # --- similarity block on the MXU: contract last dims (no transpose), f32 acc.
    #     1/temperature is already folded into both operands (sqrt(1/T) per side). ---
    s = lax.dot_general(zr_ref[...], zc_ref[...],
                        dimension_numbers=(((1,), (1,)), ((), ())),
                        preferred_element_type=jnp.float32)

    # --- masks: padding via pre-baked column bias (one add); self pairs via a single
    #     iota-difference compare against a scalar offset. ---
    col_bias = colb_ref[...]                                     # (1, tc)
    r_idx = lax.broadcasted_iota(jnp.int32, (tb, tc), 0)
    c_idx = lax.broadcasted_iota(jnp.int32, (tb, tc), 1)
    is_diag = (c_idx - r_idx) == (i * tb - k * tc)

    neg_big = jnp.float32(-1e30)
    s_m = jnp.where(is_diag, neg_big, s + col_bias)

    # --- positive-pair logit sum; positive *counts* are precomputed in XLA ---
    pos = ((lab_r_ref[...] == lab_c_ref[...])
           & jnp.logical_not(is_diag)
           & (col_bias > jnp.float32(-1.0)))
    ps_blk = jnp.sum(jnp.where(pos, s, 0.0), axis=-1, keepdims=True)

    if single_col:
        # Whole row of the similarity matrix in one block: no scratch round-trips.
        if use_static_max:
            m_fin = jnp.float32(inv_t)          # |s_ij| <= 1/T (L2-normalized rows)
        else:
            m_fin = jnp.max(s_m, axis=-1, keepdims=True)
        l_fin = jnp.sum(jnp.exp(s_m - m_fin), axis=-1, keepdims=True)
        ps_fin = ps_blk
    elif use_static_max:
        # Streaming columns, static logsumexp shift: plain accumulation, no rescale.
        @pl.when(k == 0)
        def _init():
            l_sc[...] = jnp.zeros_like(l_sc)
            ps_sc[...] = jnp.zeros_like(ps_sc)
        l_sc[...] = l_sc[...] + jnp.sum(
            jnp.exp(s_m - jnp.float32(inv_t)), axis=-1, keepdims=True)
        ps_sc[...] = ps_sc[...] + ps_blk
    else:
        # Streaming columns, online-softmax fallback (very small temperatures).
        @pl.when(k == 0)
        def _init():
            m_sc[...] = jnp.full_like(m_sc, -jnp.inf)
            l_sc[...] = jnp.zeros_like(l_sc)
            ps_sc[...] = jnp.zeros_like(ps_sc)
        m_prev = m_sc[...]
        m_new = jnp.maximum(m_prev, jnp.max(s_m, axis=-1, keepdims=True))
        l_sc[...] = l_sc[...] * jnp.exp(m_prev - m_new) + jnp.sum(
            jnp.exp(s_m - m_new), axis=-1, keepdims=True)
        m_sc[...] = m_new
        ps_sc[...] = ps_sc[...] + ps_blk

    @pl.when(k == nk - 1)
    def _finalize():
        if single_col:
            m_f, l_f, ps_f = m_fin, l_fin, ps_fin
        else:
            m_f = jnp.float32(inv_t) if use_static_max else m_sc[...]
            l_f, ps_f = l_sc[...], ps_sc[...]
        lse = m_f + jnp.log(l_f)
        cnt = pc_ref[...]                        # |P(i)|; 0 for padded rows
        has_pos = cnt > 0.0
        per_anchor = jnp.where(has_pos, lse - ps_f / jnp.maximum(cnt, 1.0), 0.0)
        w_eff = jnp.where(has_pos, w_ref[...], 0.0)      # padded anchors weigh 0
        wl_ref[...] = w_eff * per_anchor
        ew_ref[...] = w_eff


def weighted_simclr_loss(embeddings, labels, weights=None, *, temperature=0.5,
                         row_tile=256, col_tile=512,
                         max_resident_bytes=16 * 1024 * 1024):
    """Weighted NT-Xent loss. embeddings: (B, D); labels: (B,); weights: (B,) or None."""
    b, d = embeddings.shape
    if weights is None:                       # WeightedLossWrapper with set_weights() unused
        weights = jnp.ones((b,), jnp.float32)

    inv_t = 1.0 / float(temperature)
    # Static logsumexp shift (m = 1/T) is safe while exp(-2/T) stays in f32 range.
    use_static_max = (2.0 * inv_t) <= 80.0
    # bf16 logit error is amplified by 1/T: fall back to f32 MXU operands for tiny T.
    use_bf16 = float(temperature) >= 0.05
    op_dtype = jnp.bfloat16 if use_bf16 else jnp.float32
    op_bytes = 2 if use_bf16 else 4

    # ---- one-shot preprocessing in XLA (hoisted out of the O(B^2) kernel grid) ----
    x = embeddings.astype(jnp.float32)
    z = x * lax.rsqrt(jnp.sum(x * x, axis=-1, keepdims=True) + 1e-12)
    z = z * (inv_t ** 0.5)                    # fold 1/T: sqrt(1/T) per side

    labels_i = labels.astype(jnp.int32)
    # |P(i)| is label-only info; fused O(B^2) bool reduce in XLA, never in the kernel.
    pos_count = (jnp.sum(labels_i[:, None] == labels_i[None, :], axis=-1) - 1
                 ).astype(jnp.float32)

    # ---- padding: 128-aligned batch, lane-dense (128-multiple) feature dim ----
    b_pad = _round_up(b, 128)
    d_pad = _round_up(d, 128)
    zp = jnp.pad(z, ((0, b_pad - b), (0, d_pad - d))).astype(op_dtype)
    lab_rows = jnp.pad(labels_i, (0, b_pad - b), constant_values=-1).reshape(b_pad, 1)
    lab_cols = lab_rows.reshape(1, b_pad)
    w_rows = jnp.pad(weights.astype(jnp.float32), (0, b_pad - b)).reshape(b_pad, 1)
    pc_rows = jnp.pad(pos_count, (0, b_pad - b)).reshape(b_pad, 1)
    col_bias = jnp.where(jnp.arange(b_pad) < b, 0.0, -1e30).astype(
        jnp.float32).reshape(1, b_pad)

    # ---- tile selection ----
    # Row tile: multiple of 16 dividing b_pad; keep nrt >= 2 once b_pad >= 256 so
    # both v7x TensorCores get work on the "parallel" axis.
    tb_cap = b_pad if b_pad < 256 else b_pad // 2
    tb = max(16, (min(int(row_tile), tb_cap) // 16) * 16)
    while b_pad % tb:
        tb -= 16

    # Column axis: make the whole column stream resident (nct = 1) when it fits the
    # conservative budget (default 16 MiB -> safe on v7x's 64 MiB VMEM); else stream
    # 128-multiple tiles.
    resident_est = (2 * b_pad * d_pad * op_bytes        # zc (double-buffered)
                    + 2 * tb * d_pad * op_bytes         # zr (double-buffered)
                    + 3 * tb * b_pad * 4                # (tb, b_pad) f32 temporaries
                    + 8 * b_pad * 4)                    # label / bias rows
    single_col = resident_est <= int(max_resident_bytes)
    if single_col:
        tc = b_pad
    else:
        tc = max(128, (min(int(col_tile), b_pad) // 128) * 128)
        while b_pad % tc:
            tc -= 128
    nrt = b_pad // tb
    nct = b_pad // tc

    est_bytes = (2 * tb * d_pad * op_bytes + 2 * tc * d_pad * op_bytes
                 + 3 * tb * tc * 4 + 8 * tc * 4 + 3 * tb * 128 * 4 + (2 << 20))
    vmem_limit = int(min(60 << 20, max(32 << 20, 2 * est_bytes)))

    kernel = functools.partial(_ntxent_kernel, inv_t=inv_t,
                               use_static_max=use_static_max, single_col=single_col)

    wl, ew = pl.pallas_call(
        kernel,
        out_shape=(jax.ShapeDtypeStruct((b_pad, 1), jnp.float32),
                   jax.ShapeDtypeStruct((b_pad, 1), jnp.float32)),
        grid_spec=pltpu.PrefetchScalarGridSpec(
            num_scalar_prefetch=0,
            grid=(nrt, nct),
            in_specs=[
                pl.BlockSpec((tb, d_pad), lambda i, k: (i, 0)),   # anchor rows
                pl.BlockSpec((tc, d_pad), lambda i, k: (k, 0)),   # column tile (constant when nct==1)
                pl.BlockSpec((tb, 1), lambda i, k: (i, 0)),       # anchor labels
                pl.BlockSpec((1, tc), lambda i, k: (0, k)),       # column labels
                pl.BlockSpec((1, tc), lambda i, k: (0, k)),       # column padding bias
                pl.BlockSpec((tb, 1), lambda i, k: (i, 0)),       # anchor weights
                pl.BlockSpec((tb, 1), lambda i, k: (i, 0)),       # anchor positive counts
            ],
            out_specs=[
                pl.BlockSpec((tb, 1), lambda i, k: (i, 0)),       # w_i * L_i
                pl.BlockSpec((tb, 1), lambda i, k: (i, 0)),       # effective weight
            ],
            scratch_shapes=[pltpu.VMEM((tb, 1), jnp.float32)] * 3,
        ),
        compiler_params=pltpu.CompilerParams(
            dimension_semantics=("parallel", "arbitrary"),
            vmem_limit_bytes=vmem_limit),
    )(zp, zp, lab_rows, lab_cols, col_bias, w_rows, pc_rows)

    # Tiny scalar glue: weighted mean over anchors that have at least one positive.
    return jnp.sum(wl) / jnp.maximum(jnp.sum(ew), 1e-12)


def _reference_loss(embeddings, labels, weights, temperature=0.5):
    """Pure-JAX f32 reference for correctness checking."""
    z = embeddings / jnp.linalg.norm(embeddings, axis=-1, keepdims=True)
    s = (z @ z.T) / temperature
    b = z.shape[0]
    eye = jnp.eye(b, dtype=bool)
    s_masked = jnp.where(eye, -1e30, s)
    lse = jax.scipy.special.logsumexp(s_masked, axis=-1, keepdims=True)
    log_prob = s_masked - lse
    pos = (labels[:, None] == labels[None, :]) & (~eye)
    pos_count = jnp.sum(pos, axis=-1)
    per_anchor = -jnp.sum(jnp.where(pos, log_prob, 0.0), axis=-1) / jnp.maximum(pos_count, 1)
    has_pos = (pos_count > 0).astype(jnp.float32)
    return jnp.sum(weights * per_anchor * has_pos) / jnp.maximum(
        jnp.sum(weights * has_pos), 1e-12)


if __name__ == "__main__":
    key = jax.random.PRNGKey(0)
    k_emb, k_w, k_emb2 = jax.random.split(key, 3)

    # --- Test 1: small SimCLR batch, default fast path (resident columns, static max, bf16) ---
    B, D = 64, 32
    embeddings = jax.random.normal(k_emb, (B, D), dtype=jnp.float32)
    labels = jnp.repeat(jnp.arange(B // 2, dtype=jnp.int32), 2)   # two views per instance
    weights = jax.random.uniform(k_w, (B,), jnp.float32, 0.5, 1.5)

    ref = _reference_loss(embeddings, labels, weights)
    loss = jax.block_until_ready(weighted_simclr_loss(embeddings, labels, weights))
    assert jnp.allclose(loss, ref, rtol=2e-2, atol=2e-2), (loss, ref)

    # --- Test 2: larger batch, forced streaming path (multi row & column tiles) ---
    B2 = 256
    embeddings2 = jax.random.normal(k_emb2, (B2, D), dtype=jnp.float32)
    labels2 = jnp.repeat(jnp.arange(B2 // 2, dtype=jnp.int32), 2)
    ref2 = _reference_loss(embeddings2, labels2, jnp.ones((B2,), jnp.float32))
    loss2 = jax.block_until_ready(
        weighted_simclr_loss(embeddings2, labels2, None,
                             row_tile=64, col_tile=128, max_resident_bytes=0))
    assert jnp.allclose(loss2, ref2, rtol=2e-2, atol=2e-2), (loss2, ref2)

    # --- Test 3: tiny temperature -> f32 operands + online-max fallback, streamed ---
    ref3 = _reference_loss(embeddings2, labels2, jnp.ones((B2,), jnp.float32),
                           temperature=0.02)
    loss3 = jax.block_until_ready(
        weighted_simclr_loss(embeddings2, labels2, None, temperature=0.02,
                             row_tile=64, col_tile=128, max_resident_bytes=0))
    assert jnp.allclose(loss3, ref3, rtol=2e-2, atol=2e-2), (loss3, ref3)

    print("KERNEL_OK")
</pallas_src>

<mosaic_0001>
module attributes {stable_mosaic.version = 11 : i64} {
  func.func @_ntxent_kernel(%arg0: i32, %arg1: i32, %arg2: memref<128x128xbf16, #tpu.memory_space<vmem>>, %arg3: memref<128x128xbf16, #tpu.memory_space<vmem>>, %arg4: memref<128x1xi32, #tpu.memory_space<vmem>>, %arg5: memref<1x128xi32, #tpu.memory_space<vmem>>, %arg6: memref<1x128xf32, #tpu.memory_space<vmem>>, %arg7: memref<128x1xf32, #tpu.memory_space<vmem>>, %arg8: memref<128x1xf32, #tpu.memory_space<vmem>>, %arg9: memref<128x1xf32, #tpu.memory_space<vmem>>, %arg10: memref<128x1xf32, #tpu.memory_space<vmem>>, %arg11: memref<128x1xf32, #tpu.memory_space<vmem>>, %arg12: memref<128x1xf32, #tpu.memory_space<vmem>>, %arg13: memref<128x1xf32, #tpu.memory_space<vmem>>) attributes {dimension_semantics = [#tpu.dimension_semantics<parallel>, #tpu.dimension_semantics<arbitrary>], iteration_bounds = array<i64: 1, 1>, scalar_prefetch = 0 : i64, scratch_operands = 3 : i64, tpu.core_type = #tpu.core_type<tc>, window_params = [{transform_indices = @transform_0, window_bounds = array<i64: 128, 128>}, {transform_indices = @transform_1, window_bounds = array<i64: 128, 128>}, {transform_indices = @transform_2, window_bounds = array<i64: 128, 1>}, {transform_indices = @transform_3, window_bounds = array<i64: 1, 128>}, {transform_indices = @transform_4, window_bounds = array<i64: 1, 128>}, {transform_indices = @transform_5, window_bounds = array<i64: 128, 1>}, {transform_indices = @transform_6, window_bounds = array<i64: 128, 1>}, {transform_indices = @transform_7, window_bounds = array<i64: 128, 1>}, {transform_indices = @transform_8, window_bounds = array<i64: 128, 1>}]} {
    %c0 = arith.constant 0 : index
    %c0_0 = arith.constant 0 : index
    %0 = vector.load %arg2[%c0, %c0_0] : memref<128x128xbf16, #tpu.memory_space<vmem>>, vector<128x128xbf16>
    %c0_1 = arith.constant 0 : index
    %c0_2 = arith.constant 0 : index
    %1 = vector.load %arg3[%c0_1, %c0_2] : memref<128x128xbf16, #tpu.memory_space<vmem>>, vector<128x128xbf16>
    %cst = arith.constant dense<0.000000e+00> : vector<128x128xf32>
    %2 = tpu.matmul %0, %1, %cst {dimension_numbers = #tpu.dot_dimension_numbers<[1], [1], [0], [0], [0, 0, 1, 0], [], []>} : vector<128x128xbf16>, vector<128x128xbf16>, vector<128x128xf32> -> vector<128x128xf32>
    %c0_3 = arith.constant 0 : index
    %c0_4 = arith.constant 0 : index
    %3 = vector.load %arg6[%c0_3, %c0_4] : memref<1x128xf32, #tpu.memory_space<vmem>>, vector<1x128xf32>
    %4 = tpu.iota {dimensions = array<i32: 0>} : vector<128x128xi32>
    %5 = tpu.iota {dimensions = array<i32: 1>} : vector<128x128xi32>
    %6 = arith.subi %5, %4 : vector<128x128xi32>
    %c128_i32 = arith.constant 128 : i32
    %7 = arith.muli %arg0, %c128_i32 : i32
    %c128_i32_5 = arith.constant 128 : i32
    %8 = arith.muli %arg1, %c128_i32_5 : i32
    %9 = arith.subi %7, %8 : i32
    %10 = vector.broadcast %9 : i32 to vector<128x128xi32>
    %11 = arith.cmpi eq, %6, %10 : vector<128x128xi32>
    %12 = vector.broadcast %3 : vector<1x128xf32> to vector<128x128xf32>
    %13 = arith.addf %2, %12 : vector<128x128xf32>
    %cst_6 = arith.constant -1.000000e+30 : f32
    %14 = vector.broadcast %cst_6 : f32 to vector<128x128xf32>
    %15 = arith.select %11, %14, %13 : vector<128x128xi1>, vector<128x128xf32>
    %c0_7 = arith.constant 0 : index
    %c0_8 = arith.constant 0 : index
    %16 = vector.load %arg4[%c0_7, %c0_8] : memref<128x1xi32, #tpu.memory_space<vmem>>, vector<128x1xi32>
    %c0_9 = arith.constant 0 : index
    %c0_10 = arith.constant 0 : index
    %17 = vector.load %arg5[%c0_9, %c0_10] : memref<1x128xi32, #tpu.memory_space<vmem>>, vector<1x128xi32>
    %18 = vector.broadcast %16 : vector<128x1xi32> to vector<128x128xi32>
    %19 = vector.broadcast %17 : vector<1x128xi32> to vector<128x128xi32>
    %20 = arith.cmpi eq, %18, %19 : vector<128x128xi32>
    %cst_11 = arith.constant dense<true> : vector<128x128xi1>
    %21 = arith.xori %11, %cst_11 : vector<128x128xi1>
    %22 = arith.andi %20, %21 : vector<128x128xi1>
    %cst_12 = arith.constant -1.000000e+00 : f32
    %23 = vector.broadcast %cst_12 : f32 to vector<1x128xf32>
    %24 = arith.cmpf ogt, %3, %23 : vector<1x128xf32>
    %25 = vector.broadcast %24 : vector<1x128xi1> to vector<128x128xi1>
    %26 = arith.andi %22, %25 : vector<128x128xi1>
    %cst_13 = arith.constant 0.000000e+00 : f32
    %27 = vector.broadcast %cst_13 : f32 to vector<128x128xf32>
    %28 = arith.select %26, %2, %27 : vector<128x128xi1>, vector<128x128xf32>
    %cst_14 = arith.constant dense<0.000000e+00> : vector<128xf32>
    %29 = vector.multi_reduction <add>, %28, %cst_14 [1] : vector<128x128xf32> to vector<128xf32>
    %30 = vector.shape_cast %29 : vector<128xf32> to vector<128x1xf32>
    %cst_15 = arith.constant 2.000000e+00 : f32
    %31 = vector.broadcast %cst_15 : f32 to vector<128x128xf32>
    %32 = arith.subf %15, %31 : vector<128x128xf32>
    %33 = math.exp %32 : vector<128x128xf32>
    %cst_16 = arith.constant dense<0.000000e+00> : vector<128xf32>
    %34 = vector.multi_reduction <add>, %33, %cst_16 [1] : vector<128x128xf32> to vector<128xf32>
    %35 = vector.shape_cast %34 : vector<128xf32> to vector<128x1xf32>
    %c0_i32 = arith.constant 0 : i32
    %36 = arith.cmpi eq, %arg1, %c0_i32 : i32
    %37 = arith.extui %36 : i1 to i32
    %cst_17 = arith.constant 2.000000e+00 : f32
    %c0_i32_18 = arith.constant 0 : i32
    %38 = arith.cmpi ne, %37, %c0_i32_18 : i32
    scf.if %38 {
      %39 = math.log %35 : vector<128x1xf32>
      %40 = vector.broadcast %cst_17 : f32 to vector<128x1xf32>
      %41 = arith.addf %40, %39 : vector<128x1xf32>
      %c0_19 = arith.constant 0 : index
      %c0_20 = arith.constant 0 : index
      %42 = vector.load %arg8[%c0_19, %c0_20] : memref<128x1xf32, #tpu.memory_space<vmem>>, vector<128x1xf32>
      %cst_21 = arith.constant 0.000000e+00 : f32
      %43 = vector.broadcast %cst_21 : f32 to vector<128x1xf32>
      %44 = arith.cmpf ogt, %42, %43 : vector<128x1xf32>
      %cst_22 = arith.constant 1.000000e+00 : f32
      %45 = vector.broadcast %cst_22 : f32 to vector<128x1xf32>
      %46 = arith.maximumf %42, %45 : vector<128x1xf32>
      %47 = arith.divf %30, %46 : vector<128x1xf32>
      %48 = arith.subf %41, %47 : vector<128x1xf32>
      %cst_23 = arith.constant 0.000000e+00 : f32
      %49 = vector.broadcast %cst_23 : f32 to vector<128x1xf32>
      %50 = arith.select %44, %48, %49 : vector<128x1xi1>, vector<128x1xf32>
      %c0_24 = arith.constant 0 : index
      %c0_25 = arith.constant 0 : index
      %51 = vector.load %arg7[%c0_24, %c0_25] : memref<128x1xf32, #tpu.memory_space<vmem>>, vector<128x1xf32>
      %cst_26 = arith.constant 0.000000e+00 : f32
      %52 = vector.broadcast %cst_26 : f32 to vector<128x1xf32>
      %53 = arith.select %44, %51, %52 : vector<128x1xi1>, vector<128x1xf32>
      %54 = arith.mulf %53, %50 : vector<128x1xf32>
      %c0_27 = arith.constant 0 : index
      %c0_28 = arith.constant 0 : index
      %55 = vector.load %arg9[%c0_27, %c0_28] : memref<128x1xf32, #tpu.memory_space<vmem>>, vector<128x1xf32>
      tpu.vector_store %arg9[%c0_27, %c0_28], %54 {strides = array<i32>} : memref<128x1xf32, #tpu.memory_space<vmem>>, vector<128x1xf32>,
      %c0_29 = arith.constant 0 : index
      %c0_30 = arith.constant 0 : index
      %56 = vector.load %arg10[%c0_29, %c0_30] : memref<128x1xf32, #tpu.memory_space<vmem>>, vector<128x1xf32>
      tpu.vector_store %arg10[%c0_29, %c0_30], %53 {strides = array<i32>} : memref<128x1xf32, #tpu.memory_space<vmem>>, vector<128x1xf32>,
    } else {
    }
    return
  }
  func.func @transform_0(%arg0: i32, %arg1: i32) -> (i32, i32) {
    %c0_i32 = arith.constant 0 : i32
    %c0_i32_0 = arith.constant 0 : i32
    return %arg0, %c0_i32 : i32, i32
  }
  func.func @transform_1(%arg0: i32, %arg1: i32) -> (i32, i32) {
    %c0_i32 = arith.constant 0 : i32
    %c0_i32_0 = arith.constant 0 : i32
    return %arg1, %c0_i32 : i32, i32
  }
  func.func @transform_2(%arg0: i32, %arg1: i32) -> (i32, i32) {
    %c0_i32 = arith.constant 0 : i32
    %c0_i32_0 = arith.constant 0 : i32
    return %arg0, %c0_i32 : i32, i32
  }
  func.func @transform_3(%arg0: i32, %arg1: i32) -> (i32, i32) {
    %c0_i32 = arith.constant 0 : i32
    %c0_i32_0 = arith.constant 0 : i32
    return %c0_i32, %arg1 : i32, i32
  }
  func.func @transform_4(%arg0: i32, %arg1: i32) -> (i32, i32) {
    %c0_i32 = arith.constant 0 : i32
    %c0_i32_0 = arith.constant 0 : i32
    return %c0_i32, %arg1 : i32, i32
  }
  func.func @transform_5(%arg0: i32, %arg1: i32) -> (i32, i32) {
    %c0_i32 = arith.constant 0 : i32
    %c0_i32_0 = arith.constant 0 : i32
    return %arg0, %c0_i32 : i32, i32
  }
  func.func @transform_6(%arg0: i32, %arg1: i32) -> (i32, i32) {
    %c0_i32 = arith.constant 0 : i32
    %c0_i32_0 = arith.constant 0 : i32
    return %arg0, %c0_i32 : i32, i32
  }
  func.func @transform_7(%arg0: i32, %arg1: i32) -> (i32, i32) {
    %c0_i32 = arith.constant 0 : i32
    %c0_i32_0 = arith.constant 0 : i32
    return %arg0, %c0_i32 : i32, i32
  }
  func.func @transform_8(%arg0: i32, %arg1: i32) -> (i32, i32) {
    %c0_i32 = arith.constant 0 : i32
    %c0_i32_0 = arith.constant 0 : i32
    return %arg0, %c0_i32 : i32, i32
  }
}

</mosaic_0001>

<llo_original>
// kernel: tpu_custom_call.1
$region0: #{tpu_custom_call.1}
  #allocation0 [shape = 'u32[]', space=smem, size = 0x4, offset = 0x4, fixed_abs, tag = 'smem constant byte address 0x4 - core index']
  #allocation1 [shape = 'u32[144,128]{1,0:T(1,128)}', space=vmem, size = 0x12000, scoped, tag = 'internal scratch']
  #allocation2 [shape = 'f32[128,1]{1,0:T(8,128)}', space=vmem, size = 0x10000, scoped, tag = 'scratch operand']
  #allocation3 [shape = 'f32[128,1]{1,0:T(8,128)}', space=vmem, size = 0x10000, scoped, tag = 'scratch operand']
  #allocation4 [shape = 'f32[128,1]{1,0:T(8,128)}', space=vmem, size = 0x10000, scoped, tag = 'scratch operand']
  %s0 = inlined_call_operand.vmem [shape: bf16[128,128], index: 0, kind: input, shape index: {}]
  %s1 = inlined_call_operand.vmem [shape: bf16[128,128], index: 1, kind: input, shape index: {}]
  %s2 = inlined_call_operand.vmem [shape: s32[128,1], index: 2, kind: input, shape index: {}]
  %s3 = inlined_call_operand.vmem [shape: s32[1,128], index: 3, kind: input, shape index: {}]
  %s4 = inlined_call_operand.vmem [shape: f32[1,128], index: 4, kind: input, shape index: {}]
  %s5 = inlined_call_operand.vmem [shape: f32[128,1], index: 5, kind: input, shape index: {}]
  %s6 = inlined_call_operand.vmem [shape: f32[128,1], index: 6, kind: input, shape index: {}]
  %s7 = inlined_call_operand.vmem [shape: f32[128,1], index: 7, kind: output, shape index: {0}]
  %s8 = inlined_call_operand.vmem [shape: f32[128,1], index: 8, kind: output, shape index: {1}]
  %9 = xla_tuple %s7, %s8
  %s10 = sld [smem:[#allocation0]]
  $region50: #{tpu_custom_call.1} parent=0
    _
  %s12 = ssub.s32 1, %s10
  %s13 = scalar_select 0, %s12, %s10
  // Predicated region
  $region2: #{tpu_custom_call.1} parent=0 // pred_check
    _
  $region3: #{tpu_custom_call.1} parent=0 // pred_check_branch
    %15 = sbr.rel (0) target = $region5
  $region4: #{tpu_custom_call.1} parent=0 // pred_region
    _
  $region5: #{tpu_custom_call.1} parent=0 // pred_fallthru
    _
  // Predicated region
  $region6: #{tpu_custom_call.1} parent=0 // pred_check
    _
  $region7: #{tpu_custom_call.1} parent=0 // pred_check_branch
    %17 = sbr.rel (0) target = $region9
  $region8: #{tpu_custom_call.1} parent=0 // pred_region
    _
  $region9: #{tpu_custom_call.1} parent=0 // pred_fallthru
    _
  // Predicated region
  $region10: #{tpu_custom_call.1} parent=0 // pred_check
    _
  $region11: #{tpu_custom_call.1} parent=0 // pred_check_branch
    %19 = sbr.rel (0) target = $region13
  $region12: #{tpu_custom_call.1} parent=0 // pred_region
    _
  $region13: #{tpu_custom_call.1} parent=0 // pred_fallthru
    _
  // Predicated region
  $region14: #{tpu_custom_call.1} parent=0 // pred_check
    _
  $region15: #{tpu_custom_call.1} parent=0 // pred_check_branch
    %21 = sbr.rel (0) target = $region17
  $region16: #{tpu_custom_call.1} parent=0 // pred_region
    _
  $region17: #{tpu_custom_call.1} parent=0 // pred_fallthru
    _
  // Predicated region
  $region18: #{tpu_custom_call.1} parent=0 // pred_check
    _
  $region19: #{tpu_custom_call.1} parent=0 // pred_check_branch
    %23 = sbr.rel (0) target = $region21
  $region20: #{tpu_custom_call.1} parent=0 // pred_region
    _
  $region21: #{tpu_custom_call.1} parent=0 // pred_fallthru
    _
  // Predicated region
  $region22: #{tpu_custom_call.1} parent=0 // pred_check
    _
  $region23: #{tpu_custom_call.1} parent=0 // pred_check_branch
    %25 = sbr.rel (0) target = $region25
  $region24: #{tpu_custom_call.1} parent=0 // pred_region
    _
  $region25: #{tpu_custom_call.1} parent=0 // pred_fallthru
    _
  // Predicated region
  $region26: #{tpu_custom_call.1} parent=0 // pred_check
    _
  $region27: #{tpu_custom_call.1} parent=0 // pred_check_branch
    %27 = sbr.rel (0) target = $region29
  $region28: #{tpu_custom_call.1} parent=0 // pred_region
    _
  $region29: #{tpu_custom_call.1} parent=0 // pred_fallthru
    _
  %v29 = vld [vmem:[%s0] sm:$0xf]
  %v30 = vld [vmem:[%s0 + $0x4] sm:$0xf]
  %v31 = vld [vmem:[%s0 + $0x8] sm:$0xf]
  %v32 = vld [vmem:[%s0 + $0xc] sm:$0xf]
  %v33 = vld [vmem:[%s0 + $0x10] sm:$0xf]
  %v34 = vld [vmem:[%s0 + $0x14] sm:$0xf]
  %v35 = vld [vmem:[%s0 + $0x18] sm:$0xf]
  %v36 = vld [vmem:[%s0 + $0x1c] sm:$0xf]
  %v37 = vld [vmem:[%s0 + $0x20] sm:$0xf]
  %v38 = vld [vmem:[%s0 + $0x24] sm:$0xf]
  %v39 = vld [vmem:[%s0 + $0x28] sm:$0xf]
  %v40 = vld [vmem:[%s0 + $0x2c] sm:$0xf]
  %v41 = vld [vmem:[%s0 + $0x30] sm:$0xf]
  %v42 = vld [vmem:[%s0 + $0x34] sm:$0xf]
  %v43 = vld [vmem:[%s0 + $0x38] sm:$0xf]
  %v44 = vld [vmem:[%s0 + $0x3c] sm:$0xf]
  %v45 = vld [vmem:[%s1] sm:$0xf]
  %v46 = vld [vmem:[%s1 + $0x4] sm:$0xf]
  %v47 = vld [vmem:[%s1 + $0x8] sm:$0xf]
  %v48 = vld [vmem:[%s1 + $0xc] sm:$0xf]
  %v49 = vld [vmem:[%s1 + $0x10] sm:$0xf]
  %v50 = vld [vmem:[%s1 + $0x14] sm:$0xf]
  %v51 = vld [vmem:[%s1 + $0x18] sm:$0xf]
  %v52 = vld [vmem:[%s1 + $0x1c] sm:$0xf]
  %v53 = vld [vmem:[%s1 + $0x20] sm:$0xf]
  %v54 = vld [vmem:[%s1 + $0x24] sm:$0xf]
  %v55 = vld [vmem:[%s1 + $0x28] sm:$0xf]
  %v56 = vld [vmem:[%s1 + $0x2c] sm:$0xf]
  %v57 = vld [vmem:[%s1 + $0x30] sm:$0xf]
  %v58 = vld [vmem:[%s1 + $0x34] sm:$0xf]
  %v59 = vld [vmem:[%s1 + $0x38] sm:$0xf]
  %v60 = vld [vmem:[%s1 + $0x3c] sm:$0xf]
  %v77 = vunpack.c.l.b16 %v29
  %v78 = vunpack.c.l.b16 %v30
  %v79 = vunpack.c.l.b16 %v31
  %v80 = vunpack.c.l.b16 %v32
  %v81 = vunpack.c.l.b16 %v33
  %v82 = vunpack.c.l.b16 %v34
  %v83 = vunpack.c.l.b16 %v35
  %v84 = vunpack.c.l.b16 %v36
  %v85 = vunpack.c.l.b16 %v37
  %v86 = vunpack.c.l.b16 %v38
  %v87 = vunpack.c.l.b16 %v39
  %v88 = vunpack.c.l.b16 %v40
  %v89 = vunpack.c.l.b16 %v41
  %v90 = vunpack.c.l.b16 %v42
  %v91 = vunpack.c.l.b16 %v43
  %v92 = vunpack.c.l.b16 %v44
  %v93 = vpack.c.b16 %v78, %v77
  %v94 = vpack.c.b16 %v80, %v79
  %v95 = vpack.c.b16 %v82, %v81
  %v96 = vpack.c.b16 %v84, %v83
  %v97 = vpack.c.b16 %v86, %v85
  %v98 = vpack.c.b16 %v88, %v87
  %v99 = vpack.c.b16 %v90, %v89
  %v100 = vpack.c.b16 %v92, %v91
  %v125 = vunpack.c.l.b16 %v45
  %v126 = vunpack.c.l.b16 %v46
  %v127 = vunpack.c.l.b16 %v47
  %v128 = vunpack.c.l.b16 %v48
  %v129 = vunpack.c.l.b16 %v49
  %v130 = vunpack.c.l.b16 %v50
  %v131 = vunpack.c.l.b16 %v51
  %v132 = vunpack.c.l.b16 %v52
  %v133 = vunpack.c.l.b16 %v53
  %v134 = vunpack.c.l.b16 %v54
  %v135 = vunpack.c.l.b16 %v55
  %v136 = vunpack.c.l.b16 %v56
  %v137 = vunpack.c.l.b16 %v57
  %v138 = vunpack.c.l.b16 %v58
  %v139 = vunpack.c.l.b16 %v59
  %v140 = vunpack.c.l.b16 %v60
  %v141 = vpack.c.b16 %v126, %v125
  %v142 = vpack.c.b16 %v128, %v127
  %v143 = vpack.c.b16 %v130, %v129
  %v144 = vpack.c.b16 %v132, %v131
  %v145 = vpack.c.b16 %v134, %v133
  %v146 = vpack.c.b16 %v136, %v135
  %v147 = vpack.c.b16 %v138, %v137
  %v148 = vpack.c.b16 %v140, %v139
  %157 = vmatprep.subr.bf16.mxu0 0
  %158 = vmatpush1.bf16.xpose.msra.mxu0 %v141
  %159 = vmatprep.subr.bf16.mxu0 0
  %160 = vmatpush1.bf16.xpose.msra.mxu0 %v142
  %161 = vmatprep.subr.bf16.mxu0 0
  %162 = vmatpush1.bf16.xpose.msra.mxu0 %v143
  %163 = vmatprep.subr.bf16.mxu0 0
  %164 = vmatpush1.bf16.xpose.msra.mxu0 %v144
  %165 = vmatprep.subr.bf16.mxu0 0
  %166 = vmatpush1.bf16.xpose.msra.mxu0 %v145
  %167 = vmatprep.subr.bf16.mxu0 0
  %168 = vmatpush1.bf16.xpose.msra.mxu0 %v146
  %169 = vmatprep.subr.bf16.mxu0 0
  %170 = vmatpush1.bf16.xpose.msra.mxu0 %v147
  %171 = vmatprep.subr.bf16.mxu0 0
  %172 = vmatpush1.bf16.xpose.msra.mxu0 %v148
  %173 = vmatprep.subr.bf16.mxu0 0
  %174 = vmatpush1.bf16.xpose.msra.mxu0 0
  %175 = vmatprep.subr.bf16.mxu0 0
  %176 = vmatpush1.bf16.xpose.msra.mxu0 0
  %177 = vmatprep.subr.bf16.mxu0 0
  %178 = vmatpush1.bf16.xpose.msra.mxu0 0
  %179 = vmatprep.subr.bf16.mxu0 0
  %180 = vmatpush1.bf16.xpose.msra.mxu0 0
  %181 = vmatprep.subr.bf16.mxu0 0
  %182 = vmatpush1.bf16.xpose.msra.mxu0 0
  %183 = vmatprep.subr.bf16.mxu0 0
  %184 = vmatpush1.bf16.xpose.msra.mxu0 0
  %185 = vmatprep.subr.bf16.mxu0 0
  %186 = vmatpush1.bf16.xpose.msra.mxu0 0
  %187 = vmatprep.subr.bf16.mxu0 0
  %188 = vmatpush1.bf16.xpose.msra.mxu0 0
  %189 = vmatprep.mubr.bf16.mxu0 0
  %190 = vmatmul.mubr.bf16.gmra.mrb[0].mxu0 %v93
  %v191 = vpop.f32.mrb[0].mxu0
  %v192 = vadd.f32 0.0, %v191
  %v193 = vpop.f32.mrb[0].mxu0
  %v194 = vpop.f32.mrb[0].mxu0
  %v195 = vadd.f32 0.0, %v194
  %v196 = vpop.f32.mrb[0].mxu0
  %197 = vmatprep.mubr.bf16.mxu0 0
  %198 = vmatmul.mubr.bf16.gmra.mrb[0].mxu0 %v94
  %v199 = vpop.f32.mrb[0].mxu0
  %v200 = vadd.f32 0.0, %v199
  %v201 = vpop.f32.mrb[0].mxu0
  %v202 = vpop.f32.mrb[0].mxu0
  %v203 = vadd.f32 0.0, %v202
  %v204 = vpop.f32.mrb[0].mxu0
  %205 = vmatprep.mubr.bf16.mxu0 0
  %206 = vmatmul.mubr.bf16.gmra.mrb[0].mxu0 %v95
  %v207 = vpop.f32.mrb[0].mxu0
  %v208 = vadd.f32 0.0, %v207
  %v209 = vpop.f32.mrb[0].mxu0
  %v210 = vpop.f32.mrb[0].mxu0
  %v211 = vadd.f32 0.0, %v210
  %v212 = vpop.f32.mrb[0].mxu0
  %213 = vmatprep.mubr.bf16.mxu0 0
  %214 = vmatmul.mubr.bf16.gmra.mrb[0].mxu0 %v96
  %v215 = vpop.f32.mrb[0].mxu0
  %v216 = vadd.f32 0.0, %v215
  %v217 = vpop.f32.mrb[0].mxu0
  %v218 = vpop.f32.mrb[0].mxu0
  %v219 = vadd.f32 0.0, %v218
  %v220 = vpop.f32.mrb[0].mxu0
  %221 = vmatprep.mubr.bf16.mxu0 0
  %222 = vmatmul.mubr.bf16.gmra.mrb[0].mxu0 %v97
  %v223 = vpop.f32.mrb[0].mxu0
  %v224 = vadd.f32 0.0, %v223
  %v225 = vpop.f32.mrb[0].mxu0
  %v226 = vpop.f32.mrb[0].mxu0
  %v227 = vadd.f32 0.0, %v226
  %v228 = vpop.f32.mrb[0].mxu0
  %229 = vmatprep.mubr.bf16.mxu0 0
  %230 = vmatmul.mubr.bf16.gmra.mrb[0].mxu0 %v98
  %v231 = vpop.f32.mrb[0].mxu0
  %v232 = vadd.f32 0.0, %v231
  %v233 = vpop.f32.mrb[0].mxu0
  %v234 = vpop.f32.mrb[0].mxu0
  %v235 = vadd.f32 0.0, %v234
  %v236 = vpop.f32.mrb[0].mxu0
  %237 = vmatprep.mubr.bf16.mxu0 0
  %238 = vmatmul.mubr.bf16.gmra.mrb[0].mxu0 %v99
  %v239 = vpop.f32.mrb[0].mxu0
  %v240 = vadd.f32 0.0, %v239
  %v241 = vpop.f32.mrb[0].mxu0
  %v242 = vpop.f32.mrb[0].mxu0
  %v243 = vadd.f32 0.0, %v242
  %v244 = vpop.f32.mrb[0].mxu0
  %245 = vmatprep.mubr.bf16.mxu0 0
  %246 = vmatmul.mubr.bf16.gmra.mrb[0].mxu0 %v100
  %v247 = vpop.f32.mrb[0].mxu0
  %v248 = vadd.f32 0.0, %v247
  %v249 = vpop.f32.mrb[0].mxu0
  %v250 = vpop.f32.mrb[0].mxu0
  %v251 = vadd.f32 0.0, %v250
  %v252 = vpop.f32.mrb[0].mxu0
  %253 = vdwg.mxu0
  %v254 = vld [vmem:[%s4] sm:$0x1]
  %v255 = vlaneseq
  %v256 = vshrl.u32 %v255, 7
  %v257 = vadd.s32 %v256, 8
  %v258 = vadd.s32 %v256, 16
  %v259 = vadd.s32 %v256, 24
  %v260 = vadd.s32 %v256, 32
  %v261 = vadd.s32 %v256, 40
  %v262 = vadd.s32 %v256, 48
  %v263 = vadd.s32 %v256, 56
  %v264 = vadd.s32 %v256, 64
  %v265 = vadd.s32 %v256, 72
  %v266 = vadd.s32 %v256, 80
  %v267 = vadd.s32 %v256, 88
  %v268 = vadd.s32 %v256, 96
  %v269 = vadd.s32 %v256, 104
  %v270 = vadd.s32 %v256, 112
  %v271 = vadd.s32 %v256, 120
  %v272 = vlaneseq
  %v273 = vand.u32 %v272, 127
  %v274 = vsub.s32 %v273, %v256
  %v275 = vsub.s32 %v273, %v257
  %v276 = vsub.s32 %v273, %v258
  %v277 = vsub.s32 %v273, %v259
  %v278 = vsub.s32 %v273, %v260
  %v279 = vsub.s32 %v273, %v261
  %v280 = vsub.s32 %v273, %v262
  %v281 = vsub.s32 %v273, %v263
  %v282 = vsub.s32 %v273, %v264
  %v283 = vsub.s32 %v273, %v265
  %v284 = vsub.s32 %v273, %v266
  %v285 = vsub.s32 %v273, %v267
  %v286 = vsub.s32 %v273, %v268
  %v287 = vsub.s32 %v273, %v269
  %v288 = vsub.s32 %v273, %v270
  %v289 = vsub.s32 %v273, %v271
  %s290 = smul.u32 0, 128
  %s291 = smul.u32 0, 128
  %s292 = ssub.s32 %s290, %s291
  %v293 = vstv %s292
  %vm294 = vcmp.eq.s32.totalorder %v274, %v293
  %vm295 = vcmp.eq.s32.totalorder %v275, %v293
  %vm296 = vcmp.eq.s32.totalorder %v276, %v293
  %vm297 = vcmp.eq.s32.totalorder %v277, %v293
  %vm298 = vcmp.eq.s32.totalorder %v278, %v293
  %vm299 = vcmp.eq.s32.totalorder %v279, %v293
  %vm300 = vcmp.eq.s32.totalorder %v280, %v293
  %vm301 = vcmp.eq.s32.totalorder %v281, %v293
  %vm302 = vcmp.eq.s32.totalorder %v282, %v293
  %vm303 = vcmp.eq.s32.totalorder %v283, %v293
  %vm304 = vcmp.eq.s32.totalorder %v284, %v293
  %vm305 = vcmp.eq.s32.totalorder %v285, %v293
  %vm306 = vcmp.eq.s32.totalorder %v286, %v293
  %vm307 = vcmp.eq.s32.totalorder %v287, %v293
  %vm308 = vcmp.eq.s32.totalorder %v288, %v293
  %vm309 = vcmp.eq.s32.totalorder %v289, %v293
  %v311 = vlaneseq
  %v312 = vshrl.u32 %v311, 7
  %v313 = vsub.s32 0, %v312
  %v314 = vrot.slane %v254, %v313
  %v316 = vadd.f32 %v192, %v314
  %v317 = vadd.f32 %v195, %v314
  %v318 = vadd.f32 %v200, %v314
  %v319 = vadd.f32 %v203, %v314
  %v320 = vadd.f32 %v208, %v314
  %v321 = vadd.f32 %v211, %v314
  %v322 = vadd.f32 %v216, %v314
  %v323 = vadd.f32 %v219, %v314
  %v324 = vadd.f32 %v224, %v314
  %v325 = vadd.f32 %v227, %v314
  %v326 = vadd.f32 %v232, %v314
  %v327 = vadd.f32 %v235, %v314
  %v328 = vadd.f32 %v240, %v314
  %v329 = vadd.f32 %v243, %v314
  %v330 = vadd.f32 %v248, %v314
  %v331 = vadd.f32 %v251, %v314
  %v332 = vsel %vm294, -1e+30, %v316
  %v333 = vsel %vm295, -1e+30, %v317
  %v334 = vsel %vm296, -1e+30, %v318
  %v335 = vsel %vm297, -1e+30, %v319
  %v336 = vsel %vm298, -1e+30, %v320
  %v337 = vsel %vm299, -1e+30, %v321
  %v338 = vsel %vm300, -1e+30, %v322
  %v339 = vsel %vm301, -1e+30, %v323
  %v340 = vsel %vm302, -1e+30, %v324
  %v341 = vsel %vm303, -1e+30, %v325
  %v342 = vsel %vm304, -1e+30, %v326
  %v343 = vsel %vm305, -1e+30, %v327
  %v344 = vsel %vm306, -1e+30, %v328
  %v345 = vsel %vm307, -1e+30, %v329
  %v346 = vsel %vm308, -1e+30, %v330
  %v347 = vsel %vm309, -1e+30, %v331
  %v348 = vld [vmem:[%s2] sm:$0xff]
  %v349 = vld [vmem:[%s2 + $0x8] sm:$0xff]
  %v350 = vld [vmem:[%s2 + $0x10] sm:$0xff]
  %v351 = vld [vmem:[%s2 + $0x18] sm:$0xff]
  %v352 = vld [vmem:[%s2 + $0x20] sm:$0xff]
  %v353 = vld [vmem:[%s2 + $0x28] sm:$0xff]
  %v354 = vld [vmem:[%s2 + $0x30] sm:$0xff]
  %v355 = vld [vmem:[%s2 + $0x38] sm:$0xff]
  %v356 = vld [vmem:[%s2 + $0x40] sm:$0xff]
  %v357 = vld [vmem:[%s2 + $0x48] sm:$0xff]
  %v358 = vld [vmem:[%s2 + $0x50] sm:$0xff]
  %v359 = vld [vmem:[%s2 + $0x58] sm:$0xff]
  %v360 = vld [vmem:[%s2 + $0x60] sm:$0xff]
  %v361 = vld [vmem:[%s2 + $0x68] sm:$0xff]
  %v362 = vld [vmem:[%s2 + $0x70] sm:$0xff]
  %v363 = vld [vmem:[%s2 + $0x78] sm:$0xff]
  %v364 = vld [vmem:[%s3] sm:$0x1]
  %365 = vset.pattern.permute.xlu0 0
  %366 = vperm.xlu0 %365, %v348
  %v367 = vpop.permute.xlu0 %366
  %368 = vset.pattern.permute.xlu0 0
  %369 = vperm.xlu0 %368, %v349
  %v370 = vpop.permute.xlu0 %369
  %371 = vset.pattern.permute.xlu0 0
  %372 = vperm.xlu0 %371, %v350
  %v373 = vpop.permute.xlu0 %372
  %374 = vset.pattern.permute.xlu0 0
  %375 = vperm.xlu0 %374, %v351
  %v376 = vpop.permute.xlu0 %375
  %377 = vset.pattern.permute.xlu0 0
  %378 = vperm.xlu0 %377, %v352
  %v379 = vpop.permute.xlu0 %378
  %380 = vset.pattern.permute.xlu0 0
  %381 = vperm.xlu0 %380, %v353
  %v382 = vpop.permute.xlu0 %381
  %383 = vset.pattern.permute.xlu0 0
  %384 = vperm.xlu0 %383, %v354
  %v385 = vpop.permute.xlu0 %384
  %386 = vset.pattern.permute.xlu0 0
  %387 = vperm.xlu0 %386, %v355
  %v388 = vpop.permute.xlu0 %387
  %389 = vset.pattern.permute.xlu0 0
  %390 = vperm.xlu0 %389, %v356
  %v391 = vpop.permute.xlu0 %390
  %392 = vset.pattern.permute.xlu0 0
  %393 = vperm.xlu0 %392, %v357
  %v394 = vpop.permute.xlu0 %393
  %395 = vset.pattern.permute.xlu0 0
  %396 = vperm.xlu0 %395, %v358
  %v397 = vpop.permute.xlu0 %396
  %398 = vset.pattern.permute.xlu0 0
  %399 = vperm.xlu0 %398, %v359
  %v400 = vpop.permute.xlu0 %399
  %401 = vset.pattern.permute.xlu0 0
  %402 = vperm.xlu0 %401, %v360
  %v403 = vpop.permute.xlu0 %402
  %404 = vset.pattern.permute.xlu0 0
  %405 = vperm.xlu0 %404, %v361
  %v406 = vpop.permute.xlu0 %405
  %407 = vset.pattern.permute.xlu0 0
  %408 = vperm.xlu0 %407, %v362
  %v409 = vpop.permute.xlu0 %408
  %410 = vset.pattern.permute.xlu0 0
  %411 = vperm.xlu0 %410, %v363
  %v412 = vpop.permute.xlu0 %411
  %v413 = vlaneseq
  %v414 = vshrl.u32 %v413, 7
  %v415 = vsub.s32 0, %v414
  %v416 = vrot.slane %v364, %v415
  %vm417 = vcmp.eq.s32.totalorder %v367, %v416
  %vm418 = vcmp.eq.s32.totalorder %v370, %v416
  %vm419 = vcmp.eq.s32.totalorder %v373, %v416
  %vm420 = vcmp.eq.s32.totalorder %v376, %v416
  %vm421 = vcmp.eq.s32.totalorder %v379, %v416
  %vm422 = vcmp.eq.s32.totalorder %v382, %v416
  %vm423 = vcmp.eq.s32.totalorder %v385, %v416
  %vm424 = vcmp.eq.s32.totalorder %v388, %v416
  %vm425 = vcmp.eq.s32.totalorder %v391, %v416
  %vm426 = vcmp.eq.s32.totalorder %v394, %v416
  %vm427 = vcmp.eq.s32.totalorder %v397, %v416
  %vm428 = vcmp.eq.s32.totalorder %v400, %v416
  %vm429 = vcmp.eq.s32.totalorder %v403, %v416
  %vm430 = vcmp.eq.s32.totalorder %v406, %v416
  %vm431 = vcmp.eq.s32.totalorder %v409, %v416
  %vm432 = vcmp.eq.s32.totalorder %v412, %v416
  %vm433 = vmxor %vm294, 1
  %vm434 = vmxor %vm295, 1
  %vm435 = vmxor %vm296, 1
  %vm436 = vmxor %vm297, 1
  %vm437 = vmxor %vm298, 1
  %vm438 = vmxor %vm299, 1
  %vm439 = vmxor %vm300, 1
  %vm440 = vmxor %vm301, 1
  %vm441 = vmxor %vm302, 1
  %vm442 = vmxor %vm303, 1
  %vm443 = vmxor %vm304, 1
  %vm444 = vmxor %vm305, 1
  %vm445 = vmxor %vm306, 1
  %vm446 = vmxor %vm307, 1
  %vm447 = vmxor %vm308, 1
  %vm448 = vmxor %vm309, 1
  %vm449 = vmand %vm417, %vm433
  %vm450 = vmand %vm418, %vm434
  %vm451 = vmand %vm419, %vm435
  %vm452 = vmand %vm420, %vm436
  %vm453 = vmand %vm421, %vm437
  %vm454 = vmand %vm422, %vm438
  %vm455 = vmand %vm423, %vm439
  %vm456 = vmand %vm424, %vm440
  %vm457 = vmand %vm425, %vm441
  %vm458 = vmand %vm426, %vm442
  %vm459 = vmand %vm427, %vm443
  %vm460 = vmand %vm428, %vm444
  %vm461 = vmand %vm429, %vm445
  %vm462 = vmand %vm430, %vm446
  %vm463 = vmand %vm431, %vm447
  %vm464 = vmand %vm432, %vm448
  %vm465 = vcmp.gt.f32.partialorder %v254, -1.0
  %v466 = vsel %vm465, 1, 0
  %v467 = vlaneseq
  %v468 = vshrl.u32 %v467, 7
  %v469 = vsub.s32 0, %v468
  %v470 = vrot.slane %v466, %v469
  %vm471 = vcmp.eq.s32.totalorder %v470, 1
  %vm472 = vmand %vm449, %vm471
  %vm473 = vmand %vm450, %vm471
  %vm474 = vmand %vm451, %vm471
  %vm475 = vmand %vm452, %vm471
  %vm476 = vmand %vm453, %vm471
  %vm477 = vmand %vm454, %vm471
  %vm478 = vmand %vm455, %vm471
  %vm479 = vmand %vm456, %vm471
  %vm480 = vmand %vm457, %vm471
  %vm481 = vmand %vm458, %vm471
  %vm482 = vmand %vm459, %vm471
  %vm483 = vmand %vm460, %vm471
  %vm484 = vmand %vm461, %vm471
  %vm485 = vmand %vm462, %vm471
  %vm486 = vmand %vm463, %vm471
  %vm487 = vmand %vm464, %vm471
  %v488 = vsel %vm472, %v192, 0.0
  %v489 = vsel %vm473, %v195, 0.0
  %v490 = vsel %vm474, %v200, 0.0
  %v491 = vsel %vm475, %v203, 0.0
  %v492 = vsel %vm476, %v208, 0.0
  %v493 = vsel %vm477, %v211, 0.0
  %v494 = vsel %vm478, %v216, 0.0
  %v495 = vsel %vm479, %v219, 0.0
  %v496 = vsel %vm480, %v224, 0.0
  %v497 = vsel %vm481, %v227, 0.0
  %v498 = vsel %vm482, %v232, 0.0
  %v499 = vsel %vm483, %v235, 0.0
  %v500 = vsel %vm484, %v240, 0.0
  %v501 = vsel %vm485, %v243, 0.0
  %v502 = vsel %vm486, %v248, 0.0
  %v503 = vsel %vm487, %v251, 0.0
  %504 = vadd.xlane.f32.xlu0 %v488
  %v505 = vpop.xlane.xlu0 %504
  %506 = vadd.xlane.f32.xlu0 %v489
  %v507 = vpop.xlane.xlu0 %506
  %508 = vadd.xlane.f32.xlu0 %v490
  %v509 = vpop.xlane.xlu0 %508
  %510 = vadd.xlane.f32.xlu0 %v491
  %v511 = vpop.xlane.xlu0 %510
  %512 = vadd.xlane.f32.xlu0 %v492
  %v513 = vpop.xlane.xlu0 %512
  %514 = vadd.xlane.f32.xlu0 %v493
  %v515 = vpop.xlane.xlu0 %514
  %516 = vadd.xlane.f32.xlu0 %v494
  %v517 = vpop.xlane.xlu0 %516
  %518 = vadd.xlane.f32.xlu0 %v495
  %v519 = vpop.xlane.xlu0 %518
  %520 = vadd.xlane.f32.xlu0 %v496
  %v521 = vpop.xlane.xlu0 %520
  %522 = vadd.xlane.f32.xlu0 %v497
  %v523 = vpop.xlane.xlu0 %522
  %524 = vadd.xlane.f32.xlu0 %v498
  %v525 = vpop.xlane.xlu0 %524
  %526 = vadd.xlane.f32.xlu0 %v499
  %v527 = vpop.xlane.xlu0 %526
  %528 = vadd.xlane.f32.xlu0 %v500
  %v529 = vpop.xlane.xlu0 %528
  %530 = vadd.xlane.f32.xlu0 %v501
  %v531 = vpop.xlane.xlu0 %530
  %532 = vadd.xlane.f32.xlu0 %v502
  %v533 = vpop.xlane.xlu0 %532
  %534 = vadd.xlane.f32.xlu0 %v503
  %v535 = vpop.xlane.xlu0 %534
  %v536 = vsub.f32 %v332, 2.0
  %v537 = vsub.f32 %v333, 2.0
  %v538 = vsub.f32 %v334, 2.0
  %v539 = vsub.f32 %v335, 2.0
  %v540 = vsub.f32 %v336, 2.0
  %v541 = vsub.f32 %v337, 2.0
  %v542 = vsub.f32 %v338, 2.0
  %v543 = vsub.f32 %v339, 2.0
  %v544 = vsub.f32 %v340, 2.0
  %v545 = vsub.f32 %v341, 2.0
  %v546 = vsub.f32 %v342, 2.0
  %v547 = vsub.f32 %v343, 2.0
  %v548 = vsub.f32 %v344, 2.0
  %v549 = vsub.f32 %v345, 2.0
  %v550 = vsub.f32 %v346, 2.0
  %v551 = vsub.f32 %v347, 2.0
  %v552 = vmul.f32 %v536, 1.442695
  %v553 = vpow.pop %v552
  %v554 = vmul.f32 %v537, 1.442695
  %v555 = vpow.pop %v554
  %v556 = vmul.f32 %v538, 1.442695
  %v557 = vpow.pop %v556
  %v558 = vmul.f32 %v539, 1.442695
  %v559 = vpow.pop %v558
  %v560 = vmul.f32 %v540, 1.442695
  %v561 = vpow.pop %v560
  %v562 = vmul.f32 %v541, 1.442695
  %v563 = vpow.pop %v562
  %v564 = vmul.f32 %v542, 1.442695
  %v565 = vpow.pop %v564
  %v566 = vmul.f32 %v543, 1.442695
  %v567 = vpow.pop %v566
  %v568 = vmul.f32 %v544, 1.442695
  %v569 = vpow.pop %v568
  %v570 = vmul.f32 %v545, 1.442695
  %v571 = vpow.pop %v570
  %v572 = vmul.f32 %v546, 1.442695
  %v573 = vpow.pop %v572
  %v574 = vmul.f32 %v547, 1.442695
  %v575 = vpow.pop %v574
  %v576 = vmul.f32 %v548, 1.442695
  %v577 = vpow.pop %v576
  %v578 = vmul.f32 %v549, 1.442695
  %v579 = vpow.pop %v578
  %v580 = vmul.f32 %v550, 1.442695
  %v581 = vpow.pop %v580
  %v582 = vmul.f32 %v551, 1.442695
  %v583 = vpow.pop %v582
  %584 = vadd.xlane.f32.xlu0 %v553
  %v585 = vpop.xlane.xlu0 %584
  %586 = vadd.xlane.f32.xlu0 %v555
  %v587 = vpop.xlane.xlu0 %586
  %588 = vadd.xlane.f32.xlu0 %v557
  %v589 = vpop.xlane.xlu0 %588
  %590 = vadd.xlane.f32.xlu0 %v559
  %v591 = vpop.xlane.xlu0 %590
  %592 = vadd.xlane.f32.xlu0 %v561
  %v593 = vpop.xlane.xlu0 %592
  %594 = vadd.xlane.f32.xlu0 %v563
  %v595 = vpop.xlane.xlu0 %594
  %596 = vadd.xlane.f32.xlu0 %v565
  %v597 = vpop.xlane.xlu0 %596
  %598 = vadd.xlane.f32.xlu0 %v567
  %v599 = vpop.xlane.xlu0 %598
  %600 = vadd.xlane.f32.xlu0 %v569
  %v601 = vpop.xlane.xlu0 %600
  %602 = vadd.xlane.f32.xlu0 %v571
  %v603 = vpop.xlane.xlu0 %602
  %604 = vadd.xlane.f32.xlu0 %v573
  %v605 = vpop.xlane.xlu0 %604
  %606 = vadd.xlane.f32.xlu0 %v575
  %v607 = vpop.xlane.xlu0 %606
  %608 = vadd.xlane.f32.xlu0 %v577
  %v609 = vpop.xlane.xlu0 %608
  %610 = vadd.xlane.f32.xlu0 %v579
  %v611 = vpop.xlane.xlu0 %610
  %612 = vadd.xlane.f32.xlu0 %v581
  %v613 = vpop.xlane.xlu0 %612
  %614 = vadd.xlane.f32.xlu0 %v583
  %v615 = vpop.xlane.xlu0 %614
  %p616 = scmp.eq.s32.totalorder 0, 0
  // Predicated region
  $region30: #{tpu_custom_call.1} parent=0 // pred_check
    %p617 = pneg %p616
  $region31: #{tpu_custom_call.1} parent=0 // pred_check_branch
    %619 = sbr.rel (%p617) target = $region33
  $region32: #{tpu_custom_call.1} parent=0 // pred_region
    %v620 = vlog2.pop %v585
    %v621 = vmul.f32 %v620, 0.6931472
    %v622 = vlog2.pop %v587
    %v623 = vmul.f32 %v622, 0.6931472
    %v624 = vlog2.pop %v589
    %v625 = vmul.f32 %v624, 0.6931472
    %v626 = vlog2.pop %v591
    %v627 = vmul.f32 %v626, 0.6931472
    %v628 = vlog2.pop %v593
    %v629 = vmul.f32 %v628, 0.6931472
    %v630 = vlog2.pop %v595
    %v631 = vmul.f32 %v630, 0.6931472
    %v632 = vlog2.pop %v597
    %v633 = vmul.f32 %v632, 0.6931472
    %v634 = vlog2.pop %v599
    %v635 = vmul.f32 %v634, 0.6931472
    %v636 = vlog2.pop %v601
    %v637 = vmul.f32 %v636, 0.6931472
    %v638 = vlog2.pop %v603
    %v639 = vmul.f32 %v638, 0.6931472
    %v640 = vlog2.pop %v605
    %v641 = vmul.f32 %v640, 0.6931472
    %v642 = vlog2.pop %v607
    %v643 = vmul.f32 %v642, 0.6931472
    %v644 = vlog2.pop %v609
    %v645 = vmul.f32 %v644, 0.6931472
    %v646 = vlog2.pop %v611
    %v647 = vmul.f32 %v646, 0.6931472
    %v648 = vlog2.pop %v613
    %v649 = vmul.f32 %v648, 0.6931472
    %v650 = vlog2.pop %v615
    %v651 = vmul.f32 %v650, 0.6931472
    %v652 = vadd.f32 %v621, 2.0
    %v653 = vadd.f32 %v623, 2.0
    %v654 = vadd.f32 %v625, 2.0
    %v655 = vadd.f32 %v627, 2.0
    %v656 = vadd.f32 %v629, 2.0
    %v657 = vadd.f32 %v631, 2.0
    %v658 = vadd.f32 %v633, 2.0
    %v659 = vadd.f32 %v635, 2.0
    %v660 = vadd.f32 %v637, 2.0
    %v661 = vadd.f32 %v639, 2.0
    %v662 = vadd.f32 %v641, 2.0
    %v663 = vadd.f32 %v643, 2.0
    %v664 = vadd.f32 %v645, 2.0
    %v665 = vadd.f32 %v647, 2.0
    %v666 = vadd.f32 %v649, 2.0
    %v667 = vadd.f32 %v651, 2.0
    %v668 = vld [vmem:[%s6] sm:$0xff]
    %v669 = vld [vmem:[%s6 + $0x8] sm:$0xff]
    %v670 = vld [vmem:[%s6 + $0x10] sm:$0xff]
    %v671 = vld [vmem:[%s6 + $0x18] sm:$0xff]
    %v672 = vld [vmem:[%s6 + $0x20] sm:$0xff]
    %v673 = vld [vmem:[%s6 + $0x28] sm:$0xff]
    %v674 = vld [vmem:[%s6 + $0x30] sm:$0xff]
    %v675 = vld [vmem:[%s6 + $0x38] sm:$0xff]
    %v676 = vld [vmem:[%s6 + $0x40] sm:$0xff]
    %v677 = vld [vmem:[%s6 + $0x48] sm:$0xff]
    %v678 = vld [vmem:[%s6 + $0x50] sm:$0xff]
    %v679 = vld [vmem:[%s6 + $0x58] sm:$0xff]
    %v680 = vld [vmem:[%s6 + $0x60] sm:$0xff]
    %v681 = vld [vmem:[%s6 + $0x68] sm:$0xff]
    %v682 = vld [vmem:[%s6 + $0x70] sm:$0xff]
    %v683 = vld [vmem:[%s6 + $0x78] sm:$0xff]
    %vm684 = vcmp.gt.f32.partialorder %v668, 0.0
    %vm685 = vcmp.gt.f32.partialorder %v669, 0.0
    %vm686 = vcmp.gt.f32.partialorder %v670, 0.0
    %vm687 = vcmp.gt.f32.partialorder %v671, 0.0
    %vm688 = vcmp.gt.f32.partialorder %v672, 0.0
    %vm689 = vcmp.gt.f32.partialorder %v673, 0.0
    %vm690 = vcmp.gt.f32.partialorder %v674, 0.0
    %vm691 = vcmp.gt.f32.partialorder %v675, 0.0
    %vm692 = vcmp.gt.f32.partialorder %v676, 0.0
    %vm693 = vcmp.gt.f32.partialorder %v677, 0.0
    %vm694 = vcmp.gt.f32.partialorder %v678, 0.0
    %vm695 = vcmp.gt.f32.partialorder %v679, 0.0
    %vm696 = vcmp.gt.f32.partialorder %v680, 0.0
    %vm697 = vcmp.gt.f32.partialorder %v681, 0.0
    %vm698 = vcmp.gt.f32.partialorder %v682, 0.0
    %vm699 = vcmp.gt.f32.partialorder %v683, 0.0
    %v700 = vmax.f32 %v668, 1.0
    %v701 = vmax.f32 %v669, 1.0
    %v702 = vmax.f32 %v670, 1.0
    %v703 = vmax.f32 %v671, 1.0
    %v704 = vmax.f32 %v672, 1.0
    %v705 = vmax.f32 %v673, 1.0
    %v706 = vmax.f32 %v674, 1.0
    %v707 = vmax.f32 %v675, 1.0
    %v708 = vmax.f32 %v676, 1.0
    %v709 = vmax.f32 %v677, 1.0
    %v710 = vmax.f32 %v678, 1.0
    %v711 = vmax.f32 %v679, 1.0
    %v712 = vmax.f32 %v680, 1.0
    %v713 = vmax.f32 %v681, 1.0
    %v714 = vmax.f32 %v682, 1.0
    %v715 = vmax.f32 %v683, 1.0
    %v716 = vrcp.pop %v700
    %v717 = vmul.f32 %v505, %v716
    %v718 = vrcp.pop %v701
    %v719 = vmul.f32 %v507, %v718
    %v720 = vrcp.pop %v702
    %v721 = vmul.f32 %v509, %v720
    %v722 = vrcp.pop %v703
    %v723 = vmul.f32 %v511, %v722
    %v724 = vrcp.pop %v704
    %v725 = vmul.f32 %v513, %v724
    %v726 = vrcp.pop %v705
    %v727 = vmul.f32 %v515, %v726
    %v728 = vrcp.pop %v706
    %v729 = vmul.f32 %v517, %v728
    %v730 = vrcp.pop %v707
    %v731 = vmul.f32 %v519, %v730
    %v732 = vrcp.pop %v708
    %v733 = vmul.f32 %v521, %v732
    %v734 = vrcp.pop %v709
    %v735 = vmul.f32 %v523, %v734
    %v736 = vrcp.pop %v710
    %v737 = vmul.f32 %v525, %v736
    %v738 = vrcp.pop %v711
    %v739 = vmul.f32 %v527, %v738
    %v740 = vrcp.pop %v712
    %v741 = vmul.f32 %v529, %v740
    %v742 = vrcp.pop %v713
    %v743 = vmul.f32 %v531, %v742
    %v744 = vrcp.pop %v714
    %v745 = vmul.f32 %v533, %v744
    %v746 = vrcp.pop %v715
    %v747 = vmul.f32 %v535, %v746
    %v748 = vsub.f32 %v652, %v717
    %v749 = vsub.f32 %v653, %v719
    %v750 = vsub.f32 %v654, %v721
    %v751 = vsub.f32 %v655, %v723
    %v752 = vsub.f32 %v656, %v725
    %v753 = vsub.f32 %v657, %v727
    %v754 = vsub.f32 %v658, %v729
    %v755 = vsub.f32 %v659, %v731
    %v756 = vsub.f32 %v660, %v733
    %v757 = vsub.f32 %v661, %v735
    %v758 = vsub.f32 %v662, %v737
    %v759 = vsub.f32 %v663, %v739
    %v760 = vsub.f32 %v664, %v741
    %v761 = vsub.f32 %v665, %v743
    %v762 = vsub.f32 %v666, %v745
    %v763 = vsub.f32 %v667, %v747
    %v764 = vsel %vm684, %v748, 0.0
    %v765 = vsel %vm685, %v749, 0.0
    %v766 = vsel %vm686, %v750, 0.0
    %v767 = vsel %vm687, %v751, 0.0
    %v768 = vsel %vm688, %v752, 0.0
    %v769 = vsel %vm689, %v753, 0.0
    %v770 = vsel %vm690, %v754, 0.0
    %v771 = vsel %vm691, %v755, 0.0
    %v772 = vsel %vm692, %v756, 0.0
    %v773 = vsel %vm693, %v757, 0.0
    %v774 = vsel %vm694, %v758, 0.0
    %v775 = vsel %vm695, %v759, 0.0
    %v776 = vsel %vm696, %v760, 0.0
    %v777 = vsel %vm697, %v761, 0.0
    %v778 = vsel %vm698, %v762, 0.0
    %v779 = vsel %vm699, %v763, 0.0
    %v780 = vld [vmem:[%s5] sm:$0xff]
    %v781 = vld [vmem:[%s5 + $0x8] sm:$0xff]
    %v782 = vld [vmem:[%s5 + $0x10] sm:$0xff]
    %v783 = vld [vmem:[%s5 + $0x18] sm:$0xff]
    %v784 = vld [vmem:[%s5 + $0x20] sm:$0xff]
    %v785 = vld [vmem:[%s5 + $0x28] sm:$0xff]
    %v786 = vld [vmem:[%s5 + $0x30] sm:$0xff]
    %v787 = vld [vmem:[%s5 + $0x38] sm:$0xff]
    %v788 = vld [vmem:[%s5 + $0x40] sm:$0xff]
    %v789 = vld [vmem:[%s5 + $0x48] sm:$0xff]
    %v790 = vld [vmem:[%s5 + $0x50] sm:$0xff]
    %v791 = vld [vmem:[%s5 + $0x58] sm:$0xff]
    %v792 = vld [vmem:[%s5 + $0x60] sm:$0xff]
    %v793 = vld [vmem:[%s5 + $0x68] sm:$0xff]
    %v794 = vld [vmem:[%s5 + $0x70] sm:$0xff]
    %v795 = vld [vmem:[%s5 + $0x78] sm:$0xff]
    %v796 = vsel %vm684, %v780, 0.0
    %v797 = vsel %vm685, %v781, 0.0
    %v798 = vsel %vm686, %v782, 0.0
    %v799 = vsel %vm687, %v783, 0.0
    %v800 = vsel %vm688, %v784, 0.0
    %v801 = vsel %vm689, %v785, 0.0
    %v802 = vsel %vm690, %v786, 0.0
    %v803 = vsel %vm691, %v787, 0.0
    %v804 = vsel %vm692, %v788, 0.0
    %v805 = vsel %vm693, %v789, 0.0
    %v806 = vsel %vm694, %v790, 0.0
    %v807 = vsel %vm695, %v791, 0.0
    %v808 = vsel %vm696, %v792, 0.0
    %v809 = vsel %vm697, %v793, 0.0
    %v810 = vsel %vm698, %v794, 0.0
    %v811 = vsel %vm699, %v795, 0.0
    %v812 = vmul.f32 %v796, %v764
    %v813 = vmul.f32 %v797, %v765
    %v814 = vmul.f32 %v798, %v766
    %v815 = vmul.f32 %v799, %v767
    %v816 = vmul.f32 %v800, %v768
    %v817 = vmul.f32 %v801, %v769
    %v818 = vmul.f32 %v802, %v770
    %v819 = vmul.f32 %v803, %v771
    %v820 = vmul.f32 %v804, %v772
    %v821 = vmul.f32 %v805, %v773
    %v822 = vmul.f32 %v806, %v774
    %v823 = vmul.f32 %v807, %v775
    %v824 = vmul.f32 %v808, %v776
    %v825 = vmul.f32 %v809, %v777
    %v826 = vmul.f32 %v810, %v778
    %v827 = vmul.f32 %v811, %v779
    %vm828 = vcmask 7168
    %829 = vst.msk [vmem:[%s7] sm:$0xff] %vm828, %v812
    %830 = vst.msk [vmem:[%s7 + $0x8] sm:$0xff] %vm828, %v813
    %831 = vst.msk [vmem:[%s7 + $0x10] sm:$0xff] %vm828, %v814
    %832 = vst.msk [vmem:[%s7 + $0x18] sm:$0xff] %vm828, %v815
    %833 = vst.msk [vmem:[%s7 + $0x20] sm:$0xff] %vm828, %v816
    %834 = vst.msk [vmem:[%s7 + $0x28] sm:$0xff] %vm828, %v817
    %835 = vst.msk [vmem:[%s7 + $0x30] sm:$0xff] %vm828, %v818
    %836 = vst.msk [vmem:[%s7 + $0x38] sm:$0xff] %vm828, %v819
    %837 = vst.msk [vmem:[%s7 + $0x40] sm:$0xff] %vm828, %v820
    %838 = vst.msk [vmem:[%s7 + $0x48] sm:$0xff] %vm828, %v821
    %839 = vst.msk [vmem:[%s7 + $0x50] sm:$0xff] %vm828, %v822
    %840 = vst.msk [vmem:[%s7 + $0x58] sm:$0xff] %vm828, %v823
    %841 = vst.msk [vmem:[%s7 + $0x60] sm:$0xff] %vm828, %v824
    %842 = vst.msk [vmem:[%s7 + $0x68] sm:$0xff] %vm828, %v825
    %843 = vst.msk [vmem:[%s7 + $0x70] sm:$0xff] %vm828, %v826
    %844 = vst.msk [vmem:[%s7 + $0x78] sm:$0xff] %vm828, %v827
    %845 = vst.msk [vmem:[%s8] sm:$0xff] %vm828, %v796
    %846 = vst.msk [vmem:[%s8 + $0x8] sm:$0xff] %vm828, %v797
    %847 = vst.msk [vmem:[%s8 + $0x10] sm:$0xff] %vm828, %v798
    %848 = vst.msk [vmem:[%s8 + $0x18] sm:$0xff] %vm828, %v799
    %849 = vst.msk [vmem:[%s8 + $0x20] sm:$0xff] %vm828, %v800
    %850 = vst.msk [vmem:[%s8 + $0x28] sm:$0xff] %vm828, %v801
    %851 = vst.msk [vmem:[%s8 + $0x30] sm:$0xff] %vm828, %v802
    %852 = vst.msk [vmem:[%s8 + $0x38] sm:$0xff] %vm828, %v803
    %853 = vst.msk [vmem:[%s8 + $0x40] sm:$0xff] %vm828, %v804
    %854 = vst.msk [vmem:[%s8 + $0x48] sm:$0xff] %vm828, %v805
    %855 = vst.msk [vmem:[%s8 + $0x50] sm:$0xff] %vm828, %v806
    %856 = vst.msk [vmem:[%s8 + $0x58] sm:$0xff] %vm828, %v807
    %857 = vst.msk [vmem:[%s8 + $0x60] sm:$0xff] %vm828, %v808
    %858 = vst.msk [vmem:[%s8 + $0x68] sm:$0xff] %vm828, %v809
    %859 = vst.msk [vmem:[%s8 + $0x70] sm:$0xff] %vm828, %v810
    %860 = vst.msk [vmem:[%s8 + $0x78] sm:$0xff] %vm828, %v811
  $region33: #{tpu_custom_call.1} parent=0 // pred_fallthru
    _
  // Predicated region
  $region34: #{tpu_custom_call.1} parent=0 // pred_check
    _
  $region35: #{tpu_custom_call.1} parent=0 // pred_check_branch
    %862 = sbr.rel (0) target = $region37
  $region36: #{tpu_custom_call.1} parent=0 // pred_region
    _
  $region37: #{tpu_custom_call.1} parent=0 // pred_fallthru
    _
  // Predicated region
  $region38: #{tpu_custom_call.1} parent=0 // pred_check
    _
  $region39: #{tpu_custom_call.1} parent=0 // pred_check_branch
    %864 = sbr.rel (0) target = $region41
  $region40: #{tpu_custom_call.1} parent=0 // pred_region
    _
  $region41: #{tpu_custom_call.1} parent=0 // pred_fallthru
    _
  // Predicated region
  $region42: #{tpu_custom_call.1} parent=0 // pred_check
    _
  $region43: #{tpu_custom_call.1} parent=0 // pred_check_branch
    %866 = sbr.rel (0) target = $region45
  $region44: #{tpu_custom_call.1} parent=0 // pred_region
    _
  $region45: #{tpu_custom_call.1} parent=0 // pred_fallthru
    _
  // Predicated region
  $region46: #{tpu_custom_call.1} parent=0 // pred_check
    _
  $region47: #{tpu_custom_call.1} parent=0 // pred_check_branch
    %868 = sbr.rel (0) target = $region49
  $region48: #{tpu_custom_call.1} parent=0 // pred_region
    _
  $region49: #{tpu_custom_call.1} parent=0 // pred_fallthru
    _

</llo_original>
